<compile_context>
chip_gen: v7x
topology: tpu7x:2x2x1
jax: 0.10.0
libtpu: 0.0.40
codegen_flags: <defaults>
</compile_context>

<pallas_src>
import jax
import jax.numpy as jnp
from jax import lax
from jax.experimental import pallas as pl
from jax.experimental.pallas import tpu as pltpu


def _round_up(x, m):
    return ((x + m - 1) // m) * m


def _tpu_defaults():
    """(tm_target, vmem_budget_bytes) tuned per TPU generation, safe fallback."""
    vmem_cap = 64 * 1024 * 1024
    kind = ""
    try:
        info = pltpu.get_tpu_info()
        vmem_cap = int(getattr(info, "vmem_capacity_bytes", vmem_cap))
    except Exception:
        pass
    try:
        kind = jax.devices()[0].device_kind.lower()
    except Exception:
        pass
    if vmem_cap >= 128 * 1024 * 1024:
        # v5e / v6e: 128 MiB physical -> ~100 MiB scoped budget.
        vmem_budget = 100 * 1024 * 1024
        tm_target = 1024 if "v6" in kind else 512   # v6e crossover ~675 rows
    else:
        # v7x (or unknown): 64 MiB physical -> leave ~8 MiB headroom.
        vmem_budget = 56 * 1024 * 1024
        tm_target = 512                             # v7x crossover ~310 rows
    return tm_target, vmem_budget


def _auto_tiles(M, hidden, inter, itemsize, tm_start, vmem_budget):
    """Pick (tm, tf, padded_F) that fit the per-generation VMEM budget."""
    pack = max(8, 32 // itemsize)                    # sublane pack: 8 f32 / 16 bf16 / 32 i8
    tm = max(pack, min(_round_up(tm_start, pack), _round_up(M, pack)))
    tf_cap = 0
    while True:
        # VMEM left for streamed weight tiles (+ f32 matmul temporaries) after
        # the f32 accumulator and the double-buffered x / out activation tiles.
        leftover = vmem_budget - tm * hidden * 4 - 4 * tm * hidden * itemsize
        denom = 6 * hidden * itemsize + 12 * tm      # 2-buf w1/w3/w2t + f32 temps per tf col
        tf_cap = (leftover // denom) // 128 * 128 if leftover > 0 else 0
        if tf_cap >= 128 or tm <= pack:
            break
        tm = max(pack, ((tm // 2) // pack) * pack)   # shrink tm and retry
    tf_cap = max(tf_cap, 128)
    if inter <= tf_cap:
        return tm, inter, inter                      # single F tile, no padding
    t = tf_cap
    while t >= 128:                                  # prefer a divisor of F (no padding)
        if inter % t == 0:
            return tm, t, inter
        t -= 128
    return tm, tf_cap, _round_up(inter, tf_cap)      # zero-pad F to a tile multiple


# (m, k) x (n, k) -> (m, n)   (x @ w.T, weights stay in torch (out, in) layout)
_DN_T = (((1,), (1,)), ((), ()))
# (m, k) x (k, n) -> (m, n)   canonical form for the pre-transposed w2
_DN_NN = (((1,), (0,)), ((), ()))


def _ffn_kernel(x_ref, w1_ref, w3_ref, w2t_ref, o_ref, acc_ref):
    # x_ref  : (tm, H)   token tile, resident across the F reduction axis
    # w1_ref : (tf, H)   gate projection tile (torch layout, contiguous slab)
    # w3_ref : (tf, H)   up   projection tile
    # w2t_ref: (tf, H)   down projection tile, PRE-TRANSPOSED to (F, H)
    # o_ref  : (tm, H)
    # acc_ref: (tm, H)   f32 accumulator over F tiles
    k = pl.program_id(1)

    x = x_ref[...]
    h1 = lax.dot_general(x, w1_ref[...], _DN_T,
                         preferred_element_type=jnp.float32)        # (tm, tf)
    h3 = lax.dot_general(x, w3_ref[...], _DN_T,
                         preferred_element_type=jnp.float32)        # (tm, tf)
    gated = (h1 * jax.nn.sigmoid(h1)) * h3                           # f32 SiLU * up
    partial = lax.dot_general(gated.astype(w2t_ref.dtype), w2t_ref[...],
                              _DN_NN, preferred_element_type=jnp.float32)

    @pl.when(k == 0)
    def _first():
        acc_ref[...] = partial                       # write, don't zero+add

    @pl.when(k > 0)
    def _accum():
        acc_ref[...] += partial

    @pl.when(k == pl.num_programs(1) - 1)
    def _finalize():
        o_ref[...] = acc_ref[...].astype(o_ref.dtype)


def feed_forward(x, w1, w2, w3, *, tm=None, tf=None, vmem_budget=None):
    """SwiGLU FFN: w2( silu(w1 x) * (w3 x) ).

    x  : (..., hidden)
    w1 : (intermediate, hidden)   -- torch nn.Linear weight layout (out, in)
    w2 : (hidden, intermediate)
    w3 : (intermediate, hidden)
    """
    hidden = x.shape[-1]
    inter = w1.shape[0]
    assert w1.shape == (inter, hidden)
    assert w3.shape == (inter, hidden)
    assert w2.shape == (hidden, inter)

    lead = x.shape[:-1]
    xt = x.reshape(-1, hidden)                       # [tokens, hidden]
    M = xt.shape[0]
    itemsize = jnp.dtype(x.dtype).itemsize

    tm_target, budget_default = _tpu_defaults()
    if tm is None:
        tm = tm_target
    if vmem_budget is None:
        vmem_budget = budget_default

    pack = max(8, 32 // itemsize)
    if tf is None:
        tm_eff, tf, Fp = _auto_tiles(M, hidden, inter, itemsize, tm, vmem_budget)
    else:
        tm_eff = max(pack, min(_round_up(tm, pack), _round_up(M, pack)))
        Fp = _round_up(inter, tf)

    Mp = _round_up(M, tm_eff)
    if Mp != M:
        xt = jnp.pad(xt, ((0, Mp - M), (0, 0)))      # padded rows gate to zero

    # TODO(synk): callers with static weights should store w2 as (F, H) (and
    # pre-pad F) once, instead of paying this transpose/pad on every call.
    w2t = jnp.transpose(w2)                          # (F, H): contiguous (tf, H) tiles
    if Fp != inter:
        pad_f = Fp - inter
        w1 = jnp.pad(w1, ((0, pad_f), (0, 0)))
        w3 = jnp.pad(w3, ((0, pad_f), (0, 0)))
        w2t = jnp.pad(w2t, ((0, pad_f), (0, 0)))

    num_m = Mp // tm_eff
    num_f = Fp // tf

    w_itemsize = jnp.dtype(w1.dtype).itemsize
    cost = pl.CostEstimate(
        flops=6 * Mp * hidden * Fp,                  # three (M,H,F)-sized matmuls
        transcendentals=Mp * Fp,                     # sigmoid inside SiLU
        bytes_accessed=(num_m * 3 * hidden * Fp * w_itemsize   # weights re-read per M tile
                        + 2 * Mp * hidden * itemsize),
    )
    common = dict(
        compiler_params=pltpu.CompilerParams(
            dimension_semantics=("parallel", "arbitrary"),
            vmem_limit_bytes=int(vmem_budget),
        ),
        cost_estimate=cost,
    )

    if num_m == 1 and num_f >= 2 and num_f % 2 == 0:
        # Decode / small-M path: split the F reduction into two "parallel"
        # chunks so both v7x TensorCores each stream half the weights; sum the
        # two f32 partials outside the kernel.
        half = num_f // 2
        partial = pl.pallas_call(
            _ffn_kernel,
            out_shape=jax.ShapeDtypeStruct((2, Mp, hidden), jnp.float32),
            grid_spec=pltpu.PrefetchScalarGridSpec(
                num_scalar_prefetch=0,
                grid=(2, half),                                     # reduction axis last
                in_specs=[
                    pl.BlockSpec((tm_eff, hidden), lambda s, k: (0, 0)),
                    pl.BlockSpec((tf, hidden), lambda s, k: (s * half + k, 0)),
                    pl.BlockSpec((tf, hidden), lambda s, k: (s * half + k, 0)),
                    pl.BlockSpec((tf, hidden), lambda s, k: (s * half + k, 0)),
                ],
                out_specs=pl.BlockSpec((None, tm_eff, hidden), lambda s, k: (s, 0, 0)),
                scratch_shapes=[pltpu.VMEM((tm_eff, hidden), jnp.float32)],
            ),
            **common,
        )(xt, w1, w3, w2t)
        out = (partial[0] + partial[1]).astype(x.dtype)
    else:
        out = pl.pallas_call(
            _ffn_kernel,
            out_shape=jax.ShapeDtypeStruct((Mp, hidden), x.dtype),
            grid_spec=pltpu.PrefetchScalarGridSpec(
                num_scalar_prefetch=0,
                grid=(num_m, num_f),                                # reduction axis last
                in_specs=[
                    pl.BlockSpec((tm_eff, hidden), lambda i, k: (i, 0)),   # x tile
                    pl.BlockSpec((tf, hidden), lambda i, k: (k, 0)),       # w1 tile
                    pl.BlockSpec((tf, hidden), lambda i, k: (k, 0)),       # w3 tile
                    pl.BlockSpec((tf, hidden), lambda i, k: (k, 0)),       # w2.T tile
                ],
                out_specs=pl.BlockSpec((tm_eff, hidden), lambda i, k: (i, 0)),
                scratch_shapes=[pltpu.VMEM((tm_eff, hidden), jnp.float32)],
            ),
            **common,
        )(xt, w1, w3, w2t)

    if Mp != M:
        out = out[:M]
    return out.reshape(*lead, hidden)


def _reference(x, w1, w2, w3):
    x32 = x.astype(jnp.float32)
    h1 = x32 @ w1.astype(jnp.float32).T
    h3 = x32 @ w3.astype(jnp.float32).T
    return (jax.nn.silu(h1) * h3) @ w2.astype(jnp.float32).T


if __name__ == "__main__":
    def make(hidden, inter, batch, seq, dtype):
        kx, k1, k2, k3 = jax.random.split(jax.random.PRNGKey(0), 4)
        x = jax.random.normal(kx, (batch, seq, hidden), jnp.float32)
        w1 = 0.05 * jax.random.normal(k1, (inter, hidden), jnp.float32)
        w2 = 0.05 * jax.random.normal(k2, (hidden, inter), jnp.float32)
        w3 = 0.05 * jax.random.normal(k3, (inter, hidden), jnp.float32)
        cast = lambda a: a.astype(dtype)
        return cast(x), cast(w1), cast(w2), cast(w3)

    # --- check 1: small f32 problem (single tile on both grid axes) --------
    x, w1, w2, w3 = make(hidden=32, inter=64, batch=2, seq=8, dtype=jnp.float32)
    out = jax.block_until_ready(feed_forward(x, w1, w2, w3))
    ref = _reference(x, w1, w2, w3)
    assert out.shape == x.shape
    assert jnp.allclose(out, ref, atol=1e-4, rtol=1e-4), "f32 mismatch vs reference"

    # --- check 2: bf16, ragged token count, multi-tile token & F axes ------
    x, w1, w2, w3 = make(hidden=128, inter=256, batch=2, seq=25, dtype=jnp.bfloat16)
    out = jax.block_until_ready(feed_forward(x, w1, w2, w3, tm=16, tf=128))
    ref = _reference(x, w1, w2, w3)
    assert out.shape == x.shape
    assert jnp.allclose(out.astype(jnp.float32), ref, atol=5e-2, rtol=5e-2), \
        "bf16 mismatch vs f32 reference"

    # --- check 3: decode-sized M -> F reduction split across 2 parallel chunks
    x, w1, w2, w3 = make(hidden=64, inter=256, batch=1, seq=4, dtype=jnp.float32)
    out = jax.block_until_ready(feed_forward(x, w1, w2, w3, tf=128))
    ref = _reference(x, w1, w2, w3)
    assert out.shape == x.shape
    assert jnp.allclose(out, ref, atol=1e-4, rtol=1e-4), "split-F mismatch vs reference"

    print("KERNEL_OK")
</pallas_src>

<mosaic_0001>
module attributes {stable_mosaic.version = 11 : i64} {
  func.func @_ffn_kernel(%arg0: i32, %arg1: i32, %arg2: memref<16x32xf32, #tpu.memory_space<vmem>>, %arg3: memref<64x32xf32, #tpu.memory_space<vmem>>, %arg4: memref<64x32xf32, #tpu.memory_space<vmem>>, %arg5: memref<64x32xf32, #tpu.memory_space<vmem>>, %arg6: memref<16x32xf32, #tpu.memory_space<vmem>>, %arg7: memref<16x32xf32, #tpu.memory_space<vmem>>) attributes {dimension_semantics = [#tpu.dimension_semantics<parallel>, #tpu.dimension_semantics<arbitrary>], iteration_bounds = array<i64: 1, 1>, scalar_prefetch = 0 : i64, scratch_operands = 1 : i64, tpu.core_type = #tpu.core_type<tc>, window_params = [{transform_indices = @transform_0, window_bounds = array<i64: 16, 32>}, {transform_indices = @transform_1, window_bounds = array<i64: 64, 32>}, {transform_indices = @transform_2, window_bounds = array<i64: 64, 32>}, {transform_indices = @transform_3, window_bounds = array<i64: 64, 32>}, {transform_indices = @transform_4, window_bounds = array<i64: 16, 32>}]} {
    %c0 = arith.constant 0 : index
    %c0_0 = arith.constant 0 : index
    %0 = vector.load %arg2[%c0, %c0_0] : memref<16x32xf32, #tpu.memory_space<vmem>>, vector<16x32xf32>
    %c0_1 = arith.constant 0 : index
    %c0_2 = arith.constant 0 : index
    %1 = vector.load %arg3[%c0_1, %c0_2] : memref<64x32xf32, #tpu.memory_space<vmem>>, vector<64x32xf32>
    %cst = arith.constant dense<0.000000e+00> : vector<16x64xf32>
    %2 = tpu.matmul %0, %1, %cst {dimension_numbers = #tpu.dot_dimension_numbers<[1], [1], [0], [0], [0, 0, 1, 0], [], []>} : vector<16x32xf32>, vector<64x32xf32>, vector<16x64xf32> -> vector<16x64xf32>
    %c0_3 = arith.constant 0 : index
    %c0_4 = arith.constant 0 : index
    %3 = vector.load %arg4[%c0_3, %c0_4] : memref<64x32xf32, #tpu.memory_space<vmem>>, vector<64x32xf32>
    %cst_5 = arith.constant dense<0.000000e+00> : vector<16x64xf32>
    %4 = tpu.matmul %0, %3, %cst_5 {dimension_numbers = #tpu.dot_dimension_numbers<[1], [1], [0], [0], [0, 0, 1, 0], [], []>} : vector<16x32xf32>, vector<64x32xf32>, vector<16x64xf32> -> vector<16x64xf32>
    %5 = arith.negf %2 : vector<16x64xf32>
    %6 = math.exp %5 : vector<16x64xf32>
    %cst_6 = arith.constant 1.000000e+00 : f32
    %7 = vector.broadcast %cst_6 : f32 to vector<16x64xf32>
    %8 = arith.addf %7, %6 : vector<16x64xf32>
    %9 = arith.divf %7, %8 : vector<16x64xf32>
    %10 = arith.mulf %2, %9 : vector<16x64xf32>
    %11 = arith.mulf %10, %4 : vector<16x64xf32>
    %c0_7 = arith.constant 0 : index
    %c0_8 = arith.constant 0 : index
    %12 = vector.load %arg5[%c0_7, %c0_8] : memref<64x32xf32, #tpu.memory_space<vmem>>, vector<64x32xf32>
    %cst_9 = arith.constant dense<0.000000e+00> : vector<16x32xf32>
    %13 = tpu.matmul %11, %12, %cst_9 {dimension_numbers = #tpu.dot_dimension_numbers<[1], [0], [0], [1], [0, 0, 1, 1], [], []>} : vector<16x64xf32>, vector<64x32xf32>, vector<16x32xf32> -> vector<16x32xf32>
    %c0_i32 = arith.constant 0 : i32
    %14 = arith.cmpi eq, %arg1, %c0_i32 : i32
    %15 = arith.extui %14 : i1 to i32
    %c0_i32_10 = arith.constant 0 : i32
    %16 = arith.cmpi ne, %15, %c0_i32_10 : i32
    scf.if %16 {
      %c0_15 = arith.constant 0 : index
      %c0_16 = arith.constant 0 : index
      %23 = vector.load %arg7[%c0_15, %c0_16] : memref<16x32xf32, #tpu.memory_space<vmem>>, vector<16x32xf32>
      tpu.vector_store %arg7[%c0_15, %c0_16], %13 {strides = array<i32>} : memref<16x32xf32, #tpu.memory_space<vmem>>, vector<16x32xf32>,
    } else {
    }
    %c0_i32_11 = arith.constant 0 : i32
    %17 = arith.cmpi sgt, %arg1, %c0_i32_11 : i32
    %18 = arith.extui %17 : i1 to i32
    %c0_i32_12 = arith.constant 0 : i32
    %19 = arith.cmpi ne, %18, %c0_i32_12 : i32
    scf.if %19 {
      %c0_15 = arith.constant 0 : index
      %c0_16 = arith.constant 0 : index
      %23 = vector.load %arg7[%c0_15, %c0_16] : memref<16x32xf32, #tpu.memory_space<vmem>>, vector<16x32xf32>
      %24 = arith.addf %23, %13 : vector<16x32xf32>
      %c0_17 = arith.constant 0 : index
      %c0_18 = arith.constant 0 : index
      %25 = vector.load %arg7[%c0_17, %c0_18] : memref<16x32xf32, #tpu.memory_space<vmem>>, vector<16x32xf32>
      tpu.vector_store %arg7[%c0_17, %c0_18], %24 {strides = array<i32>} : memref<16x32xf32, #tpu.memory_space<vmem>>, vector<16x32xf32>,
    } else {
    }
    %c0_i32_13 = arith.constant 0 : i32
    %20 = arith.cmpi eq, %arg1, %c0_i32_13 : i32
    %21 = arith.extui %20 : i1 to i32
    %c0_i32_14 = arith.constant 0 : i32
    %22 = arith.cmpi ne, %21, %c0_i32_14 : i32
    scf.if %22 {
      %c0_15 = arith.constant 0 : index
      %c0_16 = arith.constant 0 : index
      %23 = vector.load %arg7[%c0_15, %c0_16] : memref<16x32xf32, #tpu.memory_space<vmem>>, vector<16x32xf32>
      %c0_17 = arith.constant 0 : index
      %c0_18 = arith.constant 0 : index
      %24 = vector.load %arg6[%c0_17, %c0_18] : memref<16x32xf32, #tpu.memory_space<vmem>>, vector<16x32xf32>
      tpu.vector_store %arg6[%c0_17, %c0_18], %23 {strides = array<i32>} : memref<16x32xf32, #tpu.memory_space<vmem>>, vector<16x32xf32>,
    } else {
    }
    return
  }
  func.func @transform_0(%arg0: i32, %arg1: i32) -> (i32, i32) {
    %c0_i32 = arith.constant 0 : i32
    %c0_i32_0 = arith.constant 0 : i32
    return %arg0, %c0_i32 : i32, i32
  }
  func.func @transform_1(%arg0: i32, %arg1: i32) -> (i32, i32) {
    %c0_i32 = arith.constant 0 : i32
    %c0_i32_0 = arith.constant 0 : i32
    return %arg1, %c0_i32 : i32, i32
  }
  func.func @transform_2(%arg0: i32, %arg1: i32) -> (i32, i32) {
    %c0_i32 = arith.constant 0 : i32
    %c0_i32_0 = arith.constant 0 : i32
    return %arg1, %c0_i32 : i32, i32
  }
  func.func @transform_3(%arg0: i32, %arg1: i32) -> (i32, i32) {
    %c0_i32 = arith.constant 0 : i32
    %c0_i32_0 = arith.constant 0 : i32
    return %arg1, %c0_i32 : i32, i32
  }
  func.func @transform_4(%arg0: i32, %arg1: i32) -> (i32, i32) {
    %c0_i32 = arith.constant 0 : i32
    %c0_i32_0 = arith.constant 0 : i32
    return %arg0, %c0_i32 : i32, i32
  }
}

</mosaic_0001>

<llo_original>
// kernel: tpu_custom_call.1
$region0: #{tpu_custom_call.1}
  #allocation0 [shape = 'u32[]', space=smem, size = 0x4, offset = 0x4, fixed_abs, tag = 'smem constant byte address 0x4 - core index']
  #allocation1 [shape = 'u32[144,128]{1,0:T(1,128)}', space=vmem, size = 0x12000, scoped, tag = 'internal scratch']
  #allocation2 [shape = 'f32[16,32]{1,0:T(8,128)}', space=vmem, size = 0x2000, scoped, tag = 'scratch operand']
  %s0 = inlined_call_operand.vmem [shape: f32[16,32], index: 0, kind: input, shape index: {}]
  %s1 = inlined_call_operand.vmem [shape: f32[64,32], index: 1, kind: input, shape index: {}]
  %s2 = inlined_call_operand.vmem [shape: f32[64,32], index: 2, kind: input, shape index: {}]
  %s3 = inlined_call_operand.vmem [shape: f32[64,32], index: 3, kind: input, shape index: {}]
  %s4 = inlined_call_operand.hbm [shape: f32[16,32], index: 4, kind: output, shape index: {}]
  %s5 = sld [smem:[#allocation0]]
  $region38: #{tpu_custom_call.1} parent=0
    _
  %s7 = ssub.s32 1, %s5
  %s8 = scalar_select 0, %s7, %s5
  $region1: #{tpu_custom_call.1} parent=0
    #allocation3 [shape = 'u8[8192]{0}', space=vmem, size = 0x2000, scoped, tag = 'output window, operand 0, single buffered']
    #allocation4 [shape = 's32[1]{0}', space=sflag, size = 0x4, scoped, tag = 'scoped memory for tpu_custom_call.1']
    %9 = vsyncpa [#allocation4], 0
    // Predicated region
    $region2: #{tpu_custom_call.1} parent=1 // pred_check
      _
    $region3: #{tpu_custom_call.1} parent=1 // pred_check_branch
      %11 = sbr.rel (0) target = $region5
    $region4: #{tpu_custom_call.1} parent=1 // pred_region
      _
    $region5: #{tpu_custom_call.1} parent=1 // pred_fallthru
      _
    // Predicated region
    $region6: #{tpu_custom_call.1} parent=1 // pred_check
      _
    $region7: #{tpu_custom_call.1} parent=1 // pred_check_branch
      %13 = sbr.rel (0) target = $region9
    $region8: #{tpu_custom_call.1} parent=1 // pred_region
      _
    $region9: #{tpu_custom_call.1} parent=1 // pred_fallthru
      _
    // Predicated region
    $region10: #{tpu_custom_call.1} parent=1 // pred_check
      _
    $region11: #{tpu_custom_call.1} parent=1 // pred_check_branch
      %15 = sbr.rel (0) target = $region13
    $region12: #{tpu_custom_call.1} parent=1 // pred_region
      _
    $region13: #{tpu_custom_call.1} parent=1 // pred_fallthru
      _
    // Predicated region
    $region14: #{tpu_custom_call.1} parent=1 // pred_check
      _
    $region15: #{tpu_custom_call.1} parent=1 // pred_check_branch
      %17 = sbr.rel (0) target = $region17
    $region16: #{tpu_custom_call.1} parent=1 // pred_region
      _
    $region17: #{tpu_custom_call.1} parent=1 // pred_fallthru
      _
    %v18 = vld [vmem:[%s0] sm:$0xff]
    %v19 = vld [vmem:[%s0 + $0x8] sm:$0xff]
    %v20 = vld [vmem:[%s1] sm:$0xff]
    %v21 = vld [vmem:[%s1 + $0x8] sm:$0xff]
    %v22 = vld [vmem:[%s1 + $0x10] sm:$0xff]
    %v23 = vld [vmem:[%s1 + $0x18] sm:$0xff]
    %v24 = vld [vmem:[%s1 + $0x20] sm:$0xff]
    %v25 = vld [vmem:[%s1 + $0x28] sm:$0xff]
    %v26 = vld [vmem:[%s1 + $0x30] sm:$0xff]
    %v27 = vld [vmem:[%s1 + $0x38] sm:$0xff]
    %vm28 = vcmask 261120
    %v30 = vsel %vm28, %v18, 0
    %v33 = vsel %vm28, %v19, 0
    %v36 = vsel %vm28, %v20, 0
    %v39 = vsel %vm28, %v21, 0
    %v42 = vsel %vm28, %v22, 0
    %v45 = vsel %vm28, %v23, 0
    %v48 = vsel %vm28, %v24, 0
    %v51 = vsel %vm28, %v25, 0
    %v54 = vsel %vm28, %v26, 0
    %v57 = vsel %vm28, %v27, 0
    %59 = vmatprep.subr.mxu0 0.0
    %60 = vmatpush1.xpose.msra.mxu0 %v36
    %61 = vmatprep.subr.mxu0 0.0
    %62 = vmatpush1.xpose.msra.mxu0 %v39
    %63 = vmatprep.subr.mxu0 0.0
    %64 = vmatpush1.xpose.msra.mxu0 %v42
    %65 = vmatprep.subr.mxu0 0.0
    %66 = vmatpush1.xpose.msra.mxu0 %v45
    %67 = vmatprep.subr.mxu0 0.0
    %68 = vmatpush1.xpose.msra.mxu0 %v48
    %69 = vmatprep.subr.mxu0 0.0
    %70 = vmatpush1.xpose.msra.mxu0 %v51
    %71 = vmatprep.subr.mxu0 0.0
    %72 = vmatpush1.xpose.msra.mxu0 %v54
    %73 = vmatprep.subr.mxu0 0.0
    %74 = vmatpush1.xpose.msra.mxu0 %v57
    %75 = vmatprep.subr.mxu0 0.0
    %76 = vmatpush1.xpose.msra.mxu0 0.0
    %77 = vmatprep.subr.mxu0 0.0
    %78 = vmatpush1.xpose.msra.mxu0 0.0
    %79 = vmatprep.subr.mxu0 0.0
    %80 = vmatpush1.xpose.msra.mxu0 0.0
    %81 = vmatprep.subr.mxu0 0.0
    %82 = vmatpush1.xpose.msra.mxu0 0.0
    %83 = vmatprep.subr.mxu0 0.0
    %84 = vmatpush1.xpose.msra.mxu0 0.0
    %85 = vmatprep.subr.mxu0 0.0
    %86 = vmatpush1.xpose.msra.mxu0 0.0
    %87 = vmatprep.subr.mxu0 0.0
    %88 = vmatpush1.xpose.msra.mxu0 0.0
    %89 = vmatprep.subr.mxu0 0.0
    %90 = vmatpush1.xpose.msra.mxu0 0.0
    %91 = vmatprep.subr.mxu0 0.0
    %92 = vmatpush1.xpose.msra.mxu0 0.0
    %93 = vmatprep.subr.mxu0 0.0
    %94 = vmatpush1.xpose.msra.mxu0 0.0
    %95 = vmatprep.subr.mxu0 0.0
    %96 = vmatpush1.xpose.msra.mxu0 0.0
    %97 = vmatprep.subr.mxu0 0.0
    %98 = vmatpush1.xpose.msra.mxu0 0.0
    %99 = vmatprep.subr.mxu0 0.0
    %100 = vmatpush1.xpose.msra.mxu0 0.0
    %101 = vmatprep.subr.mxu0 0.0
    %102 = vmatpush1.xpose.msra.mxu0 0.0
    %103 = vmatprep.subr.mxu0 0.0
    %104 = vmatpush1.xpose.msra.mxu0 0.0
    %105 = vmatprep.subr.mxu0 0.0
    %106 = vmatpush1.xpose.msra.mxu0 0.0
    %107 = vmatprep.subr.mxu0 0.0
    %108 = vmatpush1.xpose.msra.mxu0 0.0
    %109 = vmatprep.subr.mxu0 0.0
    %110 = vmatpush1.xpose.msra.mxu0 0.0
    %111 = vmatprep.subr.mxu0 0.0
    %112 = vmatpush1.xpose.msra.mxu0 0.0
    %113 = vmatprep.subr.mxu0 0.0
    %114 = vmatpush1.xpose.msra.mxu0 0.0
    %115 = vmatprep.subr.mxu0 0.0
    %116 = vmatpush1.xpose.msra.mxu0 0.0
    %117 = vmatprep.subr.mxu0 0.0
    %118 = vmatpush1.xpose.msra.mxu0 0.0
    %119 = vmatprep.subr.mxu0 0.0
    %120 = vmatpush1.xpose.msra.mxu0 0.0
    %121 = vmatprep.subr.mxu0 0.0
    %122 = vmatpush1.xpose.msra.mxu0 0.0
    %123 = vmatprep.mubr.f32.mxu0 0.0
    %124 = vmatmul.mubr.f32.gmra.mrb[0].mxu0 %v30
    %v125 = vpop.f32.mrb[0].mxu0
    %v126 = vadd.f32 0.0, %v125
    %v127 = vpop.f32.mrb[0].mxu0
    %128 = vmatprep.mubr.f32.mxu0 0.0
    %129 = vmatmul.mubr.f32.gmra.mrb[0].mxu0 %v33
    %v130 = vpop.f32.mrb[0].mxu0
    %v131 = vadd.f32 0.0, %v130
    %v132 = vpop.f32.mrb[0].mxu0
    %133 = vdwg.mxu0
    %v134 = vld [vmem:[%s2] sm:$0xff]
    %v135 = vld [vmem:[%s2 + $0x8] sm:$0xff]
    %v136 = vld [vmem:[%s2 + $0x10] sm:$0xff]
    %v137 = vld [vmem:[%s2 + $0x18] sm:$0xff]
    %v138 = vld [vmem:[%s2 + $0x20] sm:$0xff]
    %v139 = vld [vmem:[%s2 + $0x28] sm:$0xff]
    %v140 = vld [vmem:[%s2 + $0x30] sm:$0xff]
    %v141 = vld [vmem:[%s2 + $0x38] sm:$0xff]
    %v143 = vsel %vm28, %v134, 0
    %v146 = vsel %vm28, %v135, 0
    %v149 = vsel %vm28, %v136, 0
    %v152 = vsel %vm28, %v137, 0
    %v155 = vsel %vm28, %v138, 0
    %v158 = vsel %vm28, %v139, 0
    %v161 = vsel %vm28, %v140, 0
    %v164 = vsel %vm28, %v141, 0
    %166 = vmatprep.subr.mxu0 0.0
    %167 = vmatpush1.xpose.msra.mxu0 %v143
    %168 = vmatprep.subr.mxu0 0.0
    %169 = vmatpush1.xpose.msra.mxu0 %v146
    %170 = vmatprep.subr.mxu0 0.0
    %171 = vmatpush1.xpose.msra.mxu0 %v149
    %172 = vmatprep.subr.mxu0 0.0
    %173 = vmatpush1.xpose.msra.mxu0 %v152
    %174 = vmatprep.subr.mxu0 0.0
    %175 = vmatpush1.xpose.msra.mxu0 %v155
    %176 = vmatprep.subr.mxu0 0.0
    %177 = vmatpush1.xpose.msra.mxu0 %v158
    %178 = vmatprep.subr.mxu0 0.0
    %179 = vmatpush1.xpose.msra.mxu0 %v161
    %180 = vmatprep.subr.mxu0 0.0
    %181 = vmatpush1.xpose.msra.mxu0 %v164
    %182 = vmatprep.subr.mxu0 0.0
    %183 = vmatpush1.xpose.msra.mxu0 0.0
    %184 = vmatprep.subr.mxu0 0.0
    %185 = vmatpush1.xpose.msra.mxu0 0.0
    %186 = vmatprep.subr.mxu0 0.0
    %187 = vmatpush1.xpose.msra.mxu0 0.0
    %188 = vmatprep.subr.mxu0 0.0
    %189 = vmatpush1.xpose.msra.mxu0 0.0
    %190 = vmatprep.subr.mxu0 0.0
    %191 = vmatpush1.xpose.msra.mxu0 0.0
    %192 = vmatprep.subr.mxu0 0.0
    %193 = vmatpush1.xpose.msra.mxu0 0.0
    %194 = vmatprep.subr.mxu0 0.0
    %195 = vmatpush1.xpose.msra.mxu0 0.0
    %196 = vmatprep.subr.mxu0 0.0
    %197 = vmatpush1.xpose.msra.mxu0 0.0
    %198 = vmatprep.subr.mxu0 0.0
    %199 = vmatpush1.xpose.msra.mxu0 0.0
    %200 = vmatprep.subr.mxu0 0.0
    %201 = vmatpush1.xpose.msra.mxu0 0.0
    %202 = vmatprep.subr.mxu0 0.0
    %203 = vmatpush1.xpose.msra.mxu0 0.0
    %204 = vmatprep.subr.mxu0 0.0
    %205 = vmatpush1.xpose.msra.mxu0 0.0
    %206 = vmatprep.subr.mxu0 0.0
    %207 = vmatpush1.xpose.msra.mxu0 0.0
    %208 = vmatprep.subr.mxu0 0.0
    %209 = vmatpush1.xpose.msra.mxu0 0.0
    %210 = vmatprep.subr.mxu0 0.0
    %211 = vmatpush1.xpose.msra.mxu0 0.0
    %212 = vmatprep.subr.mxu0 0.0
    %213 = vmatpush1.xpose.msra.mxu0 0.0
    %214 = vmatprep.subr.mxu0 0.0
    %215 = vmatpush1.xpose.msra.mxu0 0.0
    %216 = vmatprep.subr.mxu0 0.0
    %217 = vmatpush1.xpose.msra.mxu0 0.0
    %218 = vmatprep.subr.mxu0 0.0
    %219 = vmatpush1.xpose.msra.mxu0 0.0
    %220 = vmatprep.subr.mxu0 0.0
    %221 = vmatpush1.xpose.msra.mxu0 0.0
    %222 = vmatprep.subr.mxu0 0.0
    %223 = vmatpush1.xpose.msra.mxu0 0.0
    %224 = vmatprep.subr.mxu0 0.0
    %225 = vmatpush1.xpose.msra.mxu0 0.0
    %226 = vmatprep.subr.mxu0 0.0
    %227 = vmatpush1.xpose.msra.mxu0 0.0
    %228 = vmatprep.subr.mxu0 0.0
    %229 = vmatpush1.xpose.msra.mxu0 0.0
    %230 = vmatprep.mubr.f32.mxu0 0.0
    %231 = vmatmul.mubr.f32.gmra.mrb[0].mxu0 %v30
    %v232 = vpop.f32.mrb[0].mxu0
    %v233 = vadd.f32 0.0, %v232
    %v234 = vpop.f32.mrb[0].mxu0
    %235 = vmatprep.mubr.f32.mxu0 0.0
    %236 = vmatmul.mubr.f32.gmra.mrb[0].mxu0 %v33
    %v237 = vpop.f32.mrb[0].mxu0
    %v238 = vadd.f32 0.0, %v237
    %v239 = vpop.f32.mrb[0].mxu0
    %240 = vdwg.mxu0
    %v241 = vxor.u32 %v126, 2147483648
    %v242 = vxor.u32 %v131, 2147483648
    %v243 = vmul.f32 %v241, 1.442695
    %v244 = vpow.pop %v243
    %v245 = vmul.f32 %v242, 1.442695
    %v246 = vpow.pop %v245
    %v247 = vadd.f32 %v244, 1.0
    %v248 = vadd.f32 %v246, 1.0
    %v249 = vrcp.pop %v247
    %v250 = vmul.f32 1.0, %v249
    %v251 = vrcp.pop %v248
    %v252 = vmul.f32 1.0, %v251
    %v253 = vmul.f32 %v126, %v250
    %v254 = vmul.f32 %v131, %v252
    %v255 = vmul.f32 %v253, %v233
    %v256 = vmul.f32 %v254, %v238
    %v257 = vld [vmem:[%s3] sm:$0xff]
    %v258 = vld [vmem:[%s3 + $0x8] sm:$0xff]
    %v259 = vld [vmem:[%s3 + $0x10] sm:$0xff]
    %v260 = vld [vmem:[%s3 + $0x18] sm:$0xff]
    %v261 = vld [vmem:[%s3 + $0x20] sm:$0xff]
    %v262 = vld [vmem:[%s3 + $0x28] sm:$0xff]
    %v263 = vld [vmem:[%s3 + $0x30] sm:$0xff]
    %v264 = vld [vmem:[%s3 + $0x38] sm:$0xff]
    %vm265 = vcmask 523264
    %v267 = vsel %vm265, %v255, 0
    %v270 = vsel %vm265, %v256, 0
    %272 = vmatprep.subr.mxu0 0.0
    %273 = vmatpush1.msra.mxu0 %v257
    %274 = vmatprep.subr.mxu0 0.0
    %275 = vmatpush1.msra.mxu0 %v258
    %276 = vmatprep.subr.mxu0 0.0
    %277 = vmatpush1.msra.mxu0 %v259
    %278 = vmatprep.subr.mxu0 0.0
    %279 = vmatpush1.msra.mxu0 %v260
    %280 = vmatprep.subr.mxu0 0.0
    %281 = vmatpush1.msra.mxu0 %v261
    %282 = vmatprep.subr.mxu0 0.0
    %283 = vmatpush1.msra.mxu0 %v262
    %284 = vmatprep.subr.mxu0 0.0
    %285 = vmatpush1.msra.mxu0 %v263
    %286 = vmatprep.subr.mxu0 0.0
    %287 = vmatpush1.msra.mxu0 %v264
    %288 = vmatprep.subr.mxu0 0.0
    %289 = vmatpush1.msra.mxu0 0.0
    %290 = vmatprep.subr.mxu0 0.0
    %291 = vmatpush1.msra.mxu0 0.0
    %292 = vmatprep.subr.mxu0 0.0
    %293 = vmatpush1.msra.mxu0 0.0
    %294 = vmatprep.subr.mxu0 0.0
    %295 = vmatpush1.msra.mxu0 0.0
    %296 = vmatprep.subr.mxu0 0.0
    %297 = vmatpush1.msra.mxu0 0.0
    %298 = vmatprep.subr.mxu0 0.0
    %299 = vmatpush1.msra.mxu0 0.0
    %300 = vmatprep.subr.mxu0 0.0
    %301 = vmatpush1.msra.mxu0 0.0
    %302 = vmatprep.subr.mxu0 0.0
    %303 = vmatpush1.msra.mxu0 0.0
    %304 = vmatprep.subr.mxu0 0.0
    %305 = vmatpush1.msra.mxu0 0.0
    %306 = vmatprep.subr.mxu0 0.0
    %307 = vmatpush1.msra.mxu0 0.0
    %308 = vmatprep.subr.mxu0 0.0
    %309 = vmatpush1.msra.mxu0 0.0
    %310 = vmatprep.subr.mxu0 0.0
    %311 = vmatpush1.msra.mxu0 0.0
    %312 = vmatprep.subr.mxu0 0.0
    %313 = vmatpush1.msra.mxu0 0.0
    %314 = vmatprep.subr.mxu0 0.0
    %315 = vmatpush1.msra.mxu0 0.0
    %316 = vmatprep.subr.mxu0 0.0
    %317 = vmatpush1.msra.mxu0 0.0
    %318 = vmatprep.subr.mxu0 0.0
    %319 = vmatpush1.msra.mxu0 0.0
    %320 = vmatprep.subr.mxu0 0.0
    %321 = vmatpush1.msra.mxu0 0.0
    %322 = vmatprep.subr.mxu0 0.0
    %323 = vmatpush1.msra.mxu0 0.0
    %324 = vmatprep.subr.mxu0 0.0
    %325 = vmatpush1.msra.mxu0 0.0
    %326 = vmatprep.subr.mxu0 0.0
    %327 = vmatpush1.msra.mxu0 0.0
    %328 = vmatprep.subr.mxu0 0.0
    %329 = vmatpush1.msra.mxu0 0.0
    %330 = vmatprep.subr.mxu0 0.0
    %331 = vmatpush1.msra.mxu0 0.0
    %332 = vmatprep.subr.mxu0 0.0
    %333 = vmatpush1.msra.mxu0 0.0
    %334 = vmatprep.subr.mxu0 0.0
    %335 = vmatpush1.msra.mxu0 0.0
    %336 = vmatprep.mubr.f32.mxu0 0.0
    %337 = vmatmul.mubr.f32.gmra.mrb[0].mxu0 %v267
    %v338 = vpop.f32.mrb[0].mxu0
    %v339 = vadd.f32 0.0, %v338
    %v340 = vpop.f32.mrb[0].mxu0
    %341 = vmatprep.mubr.f32.mxu0 0.0
    %342 = vmatmul.mubr.f32.gmra.mrb[0].mxu0 %v270
    %v343 = vpop.f32.mrb[0].mxu0
    %v344 = vadd.f32 0.0, %v343
    %v345 = vpop.f32.mrb[0].mxu0
    %346 = vdwg.mxu0
    %p347 = scmp.eq.s32.totalorder 0, 0
    // Predicated region
    $region18: #{tpu_custom_call.1} parent=1 // pred_check
      %p348 = pneg %p347
    $region19: #{tpu_custom_call.1} parent=1 // pred_check_branch
      %350 = sbr.rel (%p348) target = $region21
    $region20: #{tpu_custom_call.1} parent=1 // pred_region
      %351 = vst.msk [vmem:[#allocation2] sm:$0xff] %vm28, %v339
      %352 = vst.msk [vmem:[#allocation2 + $0x8] sm:$0xff] %vm28, %v344
    $region21: #{tpu_custom_call.1} parent=1 // pred_fallthru
      _
    %p353 = scmp.gt.s32.totalorder 0, 0
    // Predicated region
    $region22: #{tpu_custom_call.1} parent=1 // pred_check
      %p354 = pneg %p353
    $region23: #{tpu_custom_call.1} parent=1 // pred_check_branch
      %356 = sbr.rel (%p354) target = $region25
    $region24: #{tpu_custom_call.1} parent=1 // pred_region
      %v357 = vld [vmem:[#allocation2] sm:$0xff]
      %v358 = vld [vmem:[#allocation2 + $0x8] sm:$0xff]
      %v359 = vadd.f32 %v357, %v339
      %v360 = vadd.f32 %v358, %v344
      %361 = vst.msk [vmem:[#allocation2] sm:$0xff] %vm28, %v359
      %362 = vst.msk [vmem:[#allocation2 + $0x8] sm:$0xff] %vm28, %v360
    $region25: #{tpu_custom_call.1} parent=1 // pred_fallthru
      _
    // Predicated region
    $region26: #{tpu_custom_call.1} parent=1 // pred_check
      %p363 = pneg %p347
    $region27: #{tpu_custom_call.1} parent=1 // pred_check_branch
      %365 = sbr.rel (%p363) target = $region29
    $region28: #{tpu_custom_call.1} parent=1 // pred_region
      %v366 = vld [vmem:[#allocation2] sm:$0xff]
      %v367 = vld [vmem:[#allocation2 + $0x8] sm:$0xff]
      %368 = vst.msk [vmem:[#allocation3] sm:$0xff] %vm28, %v366
      %369 = vst.msk [vmem:[#allocation3 + $0x8] sm:$0xff] %vm28, %v367
    $region29: #{tpu_custom_call.1} parent=1 // pred_fallthru
      _
    // Predicated region
    $region30: #{tpu_custom_call.1} parent=1 // pred_check
      _
    $region31: #{tpu_custom_call.1} parent=1 // pred_check_branch
      %371 = sbr.rel (0) target = $region33
    $region32: #{tpu_custom_call.1} parent=1 // pred_region
      %s373 = ssub.s32 256, 256
      %374 = vsyncadd [#allocation4], %s373
      %s375 = sshll.u32 [#allocation3], 4
      %s376 = int_to_ptr.vmem [resolvable:$true] %s375
      %381 = dma.vmem_to_hbm [thread:$0]  %s376, 256, %s4, [#allocation4], 128, 128, 8
    $region33: #{tpu_custom_call.1} parent=1 // pred_fallthru
      _
    // Predicated region
    $region34: #{tpu_custom_call.1} parent=1 // pred_check
      _
    $region35: #{tpu_custom_call.1} parent=1 // pred_check_branch
      %383 = sbr.rel (0) target = $region37
    $region36: #{tpu_custom_call.1} parent=1 // pred_region
      %384 = dma.done [#allocation4], 256
    $region37: #{tpu_custom_call.1} parent=1 // pred_fallthru
      _
    %385 = vsyncpa [#allocation4], 1

</llo_original>
